<compile_context>
chip_gen: v7x
topology: tpu7x:2x2x1
jax: 0.10.0
libtpu: 0.0.40
codegen_flags: <defaults>
</compile_context>

<pallas_src>
import jax
import jax.numpy as jnp
from jax import lax
from jax.experimental import pallas as pl
from jax.experimental.pallas import tpu as pltpu


def cross_attn_kernel(q_ref, kv_ref, wqk_ref, wv_ref, o_ref):
    """One (q, kv) problem per grid step.

    q_ref   : (Nq, q_dim)      bf16
    kv_ref  : (Nk, kv_dim)     bf16
    wqk_ref : (q_dim, kv_dim)  bf16   (fused Wq @ Wk.T)
    wv_ref  : (kv_dim, out)    bf16
    o_ref   : (Nq, out)        f32
    """
    q = q_ref[...]
    kv = kv_ref[...]

    # Fused logits projection: q (Wq Wk^T) -> (Nq, kv_dim), f32 accumulation.
    qw = jnp.dot(q, wqk_ref[...], preferred_element_type=jnp.float32)

    # logits = (q W_qk) @ kv^T, contracting the LAST axes of both operands
    # (trans-rhs MXU form — no materialized transpose through the XLU).
    logits = lax.dot_general(
        qw.astype(jnp.bfloat16), kv,
        dimension_numbers=(((1,), (1,)), ((), ())),
        preferred_element_type=jnp.float32,
    )  # (Nq, Nk)

    # v_proj = kv @ Wv, f32 accumulation on the MXU.
    v_proj = jnp.dot(kv, wv_ref[...], preferred_element_type=jnp.float32)

    # Numerically-stable softmax over keys (matches F.softmax(att, dim=1)).
    # Kept in f32 on the VPU/EUP; cast to bf16 only at the MXU boundary below.
    logits = logits - jnp.max(logits, axis=1, keepdims=True)
    p = jnp.exp(logits)
    p = p * pl.reciprocal(jnp.sum(p, axis=1, keepdims=True), approx=False)

    o_ref[...] = jnp.dot(
        p.astype(jnp.bfloat16), v_proj.astype(jnp.bfloat16),
        preferred_element_type=jnp.float32,
    ).astype(o_ref.dtype)


def prepare_params(Wq, Wk, Wv):
    """One-time (per-parameter) precompute, hoisted out of the forward path.

    W_qk = Wq @ Wk.T is the exact re-association of (q Wq)(kv Wk)^T, so the
    in-kernel contractions run over q_dim/kv_dim instead of qk_proj (=400 by
    default) and the k_proj intermediate disappears. Weights are stored bf16;
    every in-kernel matmul still requests f32 accumulation.
    """
    W_qk = jnp.dot(Wq, Wk.T, preferred_element_type=jnp.float32)
    return W_qk.astype(jnp.bfloat16), Wv.astype(jnp.bfloat16)


@jax.jit
def cross_attention_layer(q, kv, W_qk, Wv_b):
    """Forward pass. Accepts (Nq, q_dim)/(Nk, kv_dim) like the PyTorch module,
    or batched (B, Nq, q_dim)/(B, Nk, kv_dim) — the batch axis becomes the
    pallas grid so many problems share one launch."""
    squeeze = q.ndim == 2
    if squeeze:
        q, kv = q[None], kv[None]

    B, Nq, q_dim = q.shape
    _, Nk, kv_dim = kv.shape
    kd2, out_features = Wv_b.shape
    assert W_qk.shape == (q_dim, kv_dim) and kd2 == kv_dim

    out = pl.pallas_call(
        cross_attn_kernel,
        out_shape=jax.ShapeDtypeStruct((B, Nq, out_features), jnp.float32),
        grid=(B,),
        in_specs=[
            pl.BlockSpec((None, Nq, q_dim), lambda b: (b, 0, 0)),
            pl.BlockSpec((None, Nk, kv_dim), lambda b: (b, 0, 0)),
            pl.BlockSpec((q_dim, kv_dim), lambda b: (0, 0)),      # broadcast
            pl.BlockSpec((kv_dim, out_features), lambda b: (0, 0)),  # broadcast
        ],
        out_specs=pl.BlockSpec((None, Nq, out_features), lambda b: (b, 0, 0)),
        compiler_params=pltpu.CompilerParams(
            dimension_semantics=("parallel",),  # lets v7x split batch over 2 TCs
        ),
    )(q.astype(jnp.bfloat16), kv.astype(jnp.bfloat16), W_qk, Wv_b)

    return out[0] if squeeze else out


def xavier_uniform(key, shape, dtype=jnp.float32):
    fan_in, fan_out = shape[0], shape[1]
    bound = (6.0 / (fan_in + fan_out)) ** 0.5
    return jax.random.uniform(key, shape, dtype, minval=-bound, maxval=bound)


def reference(q, kv, Wq, Wk, Wv):
    # Exact f32 PyTorch-ordering reference for one problem.
    q_proj = q @ Wq
    k_proj = kv @ Wk
    v_proj = kv @ Wv
    att = jax.nn.softmax(q_proj @ k_proj.T, axis=1)
    return att @ v_proj


if __name__ == "__main__":
    # Small shapes consistent with the module; batch of independent problems.
    B = 4
    Nq, Nk = 8, 16
    q_dim, kv_dim = 32, 32
    qk_proj, out_features = 128, 64

    key = jax.random.PRNGKey(0)
    k_q, k_kv, k_wq, k_wk, k_wv, k_a = jax.random.split(key, 6)

    q = jax.random.normal(k_q, (B, Nq, q_dim), jnp.float32)
    kv = jax.random.normal(k_kv, (B, Nk, kv_dim), jnp.float32)

    Wq = xavier_uniform(k_wq, (q_dim, qk_proj))
    Wk = xavier_uniform(k_wk, (kv_dim, qk_proj))
    Wv = xavier_uniform(k_wv, (kv_dim, out_features))
    # `a`, dropout, leakyrelu, adj exist in __init__ but are unused in forward().
    a_param = xavier_uniform(k_a, (2 * (qk_proj + out_features), 1))

    # One-time parameter prep (hoisted out of the forward path).
    W_qk, Wv_b = prepare_params(Wq, Wk, Wv)

    # Batched forward (grid=(B,)).
    out = cross_attention_layer(q, kv, W_qk, Wv_b)
    out = jax.block_until_ready(out)
    assert out.shape == (B, Nq, out_features)

    # Unbatched path — exact signature of the PyTorch module's forward.
    out0 = cross_attention_layer(q[0], kv[0], W_qk, Wv_b)
    out0 = jax.block_until_ready(out0)
    assert out0.shape == (Nq, out_features)

    # Validate against the exact f32 torch-ordering reference. Tolerance is
    # loose because (a) W_qk = Wq @ Wk.T re-associates the logits matmul and
    # (b) the MXU operands are bf16 (f32 accumulation), both of which change
    # rounding relative to the pure-f32 reference.
    ref = jax.vmap(lambda qq, kk: reference(qq, kk, Wq, Wk, Wv))(q, kv)
    assert jnp.allclose(out, ref, atol=1e-1, rtol=1e-1), "mismatch vs reference"
    assert jnp.allclose(out0, ref[0], atol=1e-1, rtol=1e-1), "mismatch (unbatched)"

    print("KERNEL_OK")
</pallas_src>

<mosaic_0001>
module attributes {stable_mosaic.version = 11 : i64} {
  func.func @cross_attn_kernel(%arg0: i32, %arg1: memref<1x8x32xbf16, #tpu.memory_space<vmem>>, %arg2: memref<1x16x32xbf16, #tpu.memory_space<vmem>>, %arg3: memref<32x32xbf16, #tpu.memory_space<vmem>>, %arg4: memref<32x64xbf16, #tpu.memory_space<vmem>>, %arg5: memref<1x8x64xf32, #tpu.memory_space<vmem>>) attributes {dimension_semantics = [#tpu.dimension_semantics<parallel>], iteration_bounds = array<i64: 4>, scalar_prefetch = 0 : i64, scratch_operands = 0 : i64, tpu.core_type = #tpu.core_type<tc>, window_params = [{transform_indices = @transform_0, window_bounds = array<i64: 1, 8, 32>}, {transform_indices = @transform_1, window_bounds = array<i64: 1, 16, 32>}, {pipeline_mode = #tpu.pipeline_mode<synchronous>, transform_indices = @transform_2, window_bounds = array<i64: 32, 32>}, {pipeline_mode = #tpu.pipeline_mode<synchronous>, transform_indices = @transform_3, window_bounds = array<i64: 32, 64>}, {transform_indices = @transform_4, window_bounds = array<i64: 1, 8, 64>}]} {
    %c0 = arith.constant 0 : index
    %c0_0 = arith.constant 0 : index
    %c0_1 = arith.constant 0 : index
    %0 = vector.load %arg1[%c0, %c0_0, %c0_1] : memref<1x8x32xbf16, #tpu.memory_space<vmem>>, vector<1x8x32xbf16>
    %1 = vector.shape_cast %0 : vector<1x8x32xbf16> to vector<8x32xbf16>
    %c0_2 = arith.constant 0 : index
    %c0_3 = arith.constant 0 : index
    %c0_4 = arith.constant 0 : index
    %2 = vector.load %arg2[%c0_2, %c0_3, %c0_4] : memref<1x16x32xbf16, #tpu.memory_space<vmem>>, vector<1x16x32xbf16>
    %3 = vector.shape_cast %2 : vector<1x16x32xbf16> to vector<16x32xbf16>
    %c0_5 = arith.constant 0 : index
    %c0_6 = arith.constant 0 : index
    %4 = vector.load %arg3[%c0_5, %c0_6] : memref<32x32xbf16, #tpu.memory_space<vmem>>, vector<32x32xbf16>
    %cst = arith.constant dense<0.000000e+00> : vector<8x32xf32>
    %5 = tpu.matmul %1, %4, %cst {dimension_numbers = #tpu.dot_dimension_numbers<[1], [0], [0], [1], [0, 0, 1, 1], [], []>} : vector<8x32xbf16>, vector<32x32xbf16>, vector<8x32xf32> -> vector<8x32xf32>
    %6 = arith.truncf %5 : vector<8x32xf32> to vector<8x32xbf16>
    %cst_7 = arith.constant dense<0.000000e+00> : vector<8x16xf32>
    %7 = tpu.matmul %6, %3, %cst_7 {dimension_numbers = #tpu.dot_dimension_numbers<[1], [1], [0], [0], [0, 0, 1, 0], [], []>} : vector<8x32xbf16>, vector<16x32xbf16>, vector<8x16xf32> -> vector<8x16xf32>
    %c0_8 = arith.constant 0 : index
    %c0_9 = arith.constant 0 : index
    %8 = vector.load %arg4[%c0_8, %c0_9] : memref<32x64xbf16, #tpu.memory_space<vmem>>, vector<32x64xbf16>
    %cst_10 = arith.constant dense<0.000000e+00> : vector<16x64xf32>
    %9 = tpu.matmul %3, %8, %cst_10 {dimension_numbers = #tpu.dot_dimension_numbers<[1], [0], [0], [1], [0, 0, 1, 1], [], []>} : vector<16x32xbf16>, vector<32x64xbf16>, vector<16x64xf32> -> vector<16x64xf32>
    %cst_11 = arith.constant dense<0xFF800000> : vector<8xf32>
    %10 = vector.multi_reduction <maximumf>, %7, %cst_11 [1] : vector<8x16xf32> to vector<8xf32>
    %11 = vector.shape_cast %10 : vector<8xf32> to vector<8x1xf32>
    %12 = vector.broadcast %11 : vector<8x1xf32> to vector<8x16xf32>
    %13 = arith.subf %7, %12 : vector<8x16xf32>
    %14 = math.exp %13 : vector<8x16xf32>
    %cst_12 = arith.constant dense<0.000000e+00> : vector<8xf32>
    %15 = vector.multi_reduction <add>, %14, %cst_12 [1] : vector<8x16xf32> to vector<8xf32>
    %16 = vector.shape_cast %15 : vector<8xf32> to vector<8x1xf32>
    %17 = tpu.reciprocal %16 : vector<8x1xf32> -> vector<8x1xf32>
    %18 = vector.broadcast %17 : vector<8x1xf32> to vector<8x16xf32>
    %19 = arith.mulf %14, %18 : vector<8x16xf32>
    %20 = arith.truncf %19 : vector<8x16xf32> to vector<8x16xbf16>
    %21 = arith.truncf %9 : vector<16x64xf32> to vector<16x64xbf16>
    %cst_13 = arith.constant dense<0.000000e+00> : vector<8x64xf32>
    %22 = tpu.matmul %20, %21, %cst_13 {dimension_numbers = #tpu.dot_dimension_numbers<[1], [0], [0], [1], [0, 0, 1, 1], [], []>} : vector<8x16xbf16>, vector<16x64xbf16>, vector<8x64xf32> -> vector<8x64xf32>
    %c0_14 = arith.constant 0 : index
    %c0_15 = arith.constant 0 : index
    %c0_16 = arith.constant 0 : index
    %23 = vector.load %arg5[%c0_14, %c0_15, %c0_16] : memref<1x8x64xf32, #tpu.memory_space<vmem>>, vector<1x8x64xf32>
    %24 = vector.shape_cast %23 : vector<1x8x64xf32> to vector<8x64xf32>
    %25 = vector.shape_cast %22 : vector<8x64xf32> to vector<1x8x64xf32>
    tpu.vector_store %arg5[%c0_14, %c0_15, %c0_16], %25 {strides = array<i32>} : memref<1x8x64xf32, #tpu.memory_space<vmem>>, vector<1x8x64xf32>,
    return
  }
  func.func @transform_0(%arg0: i32) -> (i32, i32, i32) {
    %c0_i32 = arith.constant 0 : i32
    %c0_i32_0 = arith.constant 0 : i32
    %c0_i32_1 = arith.constant 0 : i32
    return %arg0, %c0_i32, %c0_i32_0 : i32, i32, i32
  }
  func.func @transform_1(%arg0: i32) -> (i32, i32, i32) {
    %c0_i32 = arith.constant 0 : i32
    %c0_i32_0 = arith.constant 0 : i32
    %c0_i32_1 = arith.constant 0 : i32
    return %arg0, %c0_i32, %c0_i32_0 : i32, i32, i32
  }
  func.func @transform_2(%arg0: i32) -> (i32, i32) {
    %c0_i32 = arith.constant 0 : i32
    %c0_i32_0 = arith.constant 0 : i32
    %c0_i32_1 = arith.constant 0 : i32
    return %c0_i32, %c0_i32_0 : i32, i32
  }
  func.func @transform_3(%arg0: i32) -> (i32, i32) {
    %c0_i32 = arith.constant 0 : i32
    %c0_i32_0 = arith.constant 0 : i32
    %c0_i32_1 = arith.constant 0 : i32
    return %c0_i32, %c0_i32_0 : i32, i32
  }
  func.func @transform_4(%arg0: i32) -> (i32, i32, i32) {
    %c0_i32 = arith.constant 0 : i32
    %c0_i32_0 = arith.constant 0 : i32
    %c0_i32_1 = arith.constant 0 : i32
    return %arg0, %c0_i32, %c0_i32_0 : i32, i32, i32
  }
}

</mosaic_0001>

<llo_original>
// kernel: cross_attention_layer.1
$region0: #{cross_attention_layer.1}
  #allocation0 [shape = 'u32[]', space=smem, size = 0x4, offset = 0x4, fixed_abs, tag = 'smem constant byte address 0x4 - core index']
  #allocation1 [shape = 'u32[144,128]{1,0:T(1,128)}', space=vmem, size = 0x12000, scoped, tag = 'internal scratch']
  %s0 = inlined_call_operand.vmem [shape: bf16[4,8,32], index: 0, kind: input, shape index: {}]
  %s1 = inlined_call_operand.vmem [shape: bf16[4,16,32], index: 1, kind: input, shape index: {}]
  %s2 = inlined_call_operand.vmem [shape: bf16[32,32], index: 2, kind: input, shape index: {}]
  %s3 = inlined_call_operand.vmem [shape: bf16[32,64], index: 3, kind: input, shape index: {}]
  %s4 = inlined_call_operand.hbm [shape: f32[4,8,64], index: 4, kind: output, shape index: {}]
  %s5 = sld [smem:[#allocation0]]
  $region49: #{cross_attention_layer.1} parent=0
    _
  %s7 = ssub.s32 1, %s5
  %s8 = scalar_select 0, %s7, %s5
  $region1: #{cross_attention_layer.1} parent=0
    #allocation2 [shape = 'u8[8192]{0}', space=vmem, size = 0x2000, scoped, tag = 'output window, operand 0']
    #allocation3 [shape = 's32[2]{0}', space=sflag, size = 0x8, scoped, tag = 'scoped memory for cross_attention_layer.1']
    %9 = vsyncpa [#allocation3], 0
    %s10 = scalar_lea.sflag [#allocation3], 1
    %11 = vsyncpa %s10, 0
    loop: start=0, step=1, limit=6
    $region2: #{cross_attention_layer.1} parent=1 // loop_pre_header
      _
    $region3: #{cross_attention_layer.1} parent=1 // loop_header
      %s13 = sphi 0, %s17
      %p14 = scmp.ge.s32.totalorder %s13, 6
      %s23 = sphi 0, %s25
      %s26 = sphi 0, %s23
      %s27 = sphi 0, %s26
      %s43 = sphi 0, %s27
      %s49 = sphi 0, %s51
      %s52 = sphi 0, %s49
      %s53 = sphi 0, %s52
      %s69 = sphi 0, %s53
      %s73 = sphi 0, %s73
      %s75 = sphi 0, %s73
      %s76 = sphi 0, %s75
      %s90 = sphi 0, %s76
      %s94 = sphi 0, %s94
      %s96 = sphi 0, %s94
      %s97 = sphi 0, %s96
      %s111 = sphi 0, %s97
      %s117 = sphi 0, %s119
      %s120 = sphi 0, %s117
      %s121 = sphi 0, %s120
      %s137 = sphi 0, %s121
    $region4: #{cross_attention_layer.1} parent=1 // loop_header_branch
      %16 = sbr.rel (%p14) target = $region8
    $region5: #{cross_attention_layer.1} parent=1 // loop_body
      %s18 = ssub.s32 %s13, 1
      %s19 = ssub.s32 %s13, 2
      %s20 = sadd.s32 %s13, 1
      %s21 = ssub.s32 %s13, %s20
      %p22 = scmp.eq.s32.totalorder %s21, 0
      %s24 = sadd.s32 %s23, 1
      %s25 = scalar_select %p22, %s23, %s24
      %p28 = pneg %p22
      %p29 = scmp.eq.s32.totalorder %s13, 3
      %p30 = por %p28, %p29
      %p31 = scmp.ne.s32.totalorder %s23, %s26
      %p32 = scmp.eq.s32.totalorder %s13, 0
      %p33 = por %p31, %p32
      %p34 = scmp.ne.s32.totalorder %s23, %s26
      %p35 = scmp.eq.s32.totalorder %s18, 3
      %p36 = por %p34, %p35
      %p37 = scmp.ne.s32.totalorder %s26, %s27
      %p38 = scmp.eq.s32.totalorder %s18, 0
      %p39 = por %p37, %p38
      %p40 = scmp.ne.s32.totalorder %s26, %s27
      %p41 = scmp.eq.s32.totalorder %s19, 3
      %p42 = por %p40, %p41
      %p44 = scmp.ne.s32.totalorder %s27, %s43
      %p45 = scmp.eq.s32.totalorder %s19, 0
      %p46 = por %p44, %p45
      %s47 = ssub.s32 %s13, %s20
      %p48 = scmp.eq.s32.totalorder %s47, 0
      %s50 = sadd.s32 %s49, 1
      %s51 = scalar_select %p48, %s49, %s50
      %p54 = pneg %p48
      %p55 = scmp.eq.s32.totalorder %s13, 3
      %p56 = por %p54, %p55
      %p57 = scmp.ne.s32.totalorder %s49, %s52
      %p58 = scmp.eq.s32.totalorder %s13, 0
      %p59 = por %p57, %p58
      %p60 = scmp.ne.s32.totalorder %s49, %s52
      %p61 = scmp.eq.s32.totalorder %s18, 3
      %p62 = por %p60, %p61
      %p63 = scmp.ne.s32.totalorder %s52, %s53
      %p64 = scmp.eq.s32.totalorder %s18, 0
      %p65 = por %p63, %p64
      %p66 = scmp.ne.s32.totalorder %s52, %s53
      %p67 = scmp.eq.s32.totalorder %s19, 3
      %p68 = por %p66, %p67
      %p70 = scmp.ne.s32.totalorder %s53, %s69
      %p71 = scmp.eq.s32.totalorder %s19, 0
      %p72 = por %p70, %p71
      %s74 = sadd.s32 %s73, 1
      %p77 = scmp.eq.s32.totalorder %s13, 3
      %p78 = scmp.ne.s32.totalorder %s73, %s75
      %p79 = scmp.eq.s32.totalorder %s13, 0
      %p80 = por %p78, %p79
      %p81 = scmp.ne.s32.totalorder %s73, %s75
      %p82 = scmp.eq.s32.totalorder %s18, 3
      %p83 = por %p81, %p82
      %p84 = scmp.ne.s32.totalorder %s75, %s76
      %p85 = scmp.eq.s32.totalorder %s18, 0
      %p86 = por %p84, %p85
      %p87 = scmp.ne.s32.totalorder %s75, %s76
      %p88 = scmp.eq.s32.totalorder %s19, 3
      %p89 = por %p87, %p88
      %p91 = scmp.ne.s32.totalorder %s76, %s90
      %p92 = scmp.eq.s32.totalorder %s19, 0
      %p93 = por %p91, %p92
      %s95 = sadd.s32 %s94, 1
      %p98 = scmp.eq.s32.totalorder %s13, 3
      %p99 = scmp.ne.s32.totalorder %s94, %s96
      %p100 = scmp.eq.s32.totalorder %s13, 0
      %p101 = por %p99, %p100
      %p102 = scmp.ne.s32.totalorder %s94, %s96
      %p103 = scmp.eq.s32.totalorder %s18, 3
      %p104 = por %p102, %p103
      %p105 = scmp.ne.s32.totalorder %s96, %s97
      %p106 = scmp.eq.s32.totalorder %s18, 0
      %p107 = por %p105, %p106
      %p108 = scmp.ne.s32.totalorder %s96, %s97
      %p109 = scmp.eq.s32.totalorder %s19, 3
      %p110 = por %p108, %p109
      %p112 = scmp.ne.s32.totalorder %s97, %s111
      %p113 = scmp.eq.s32.totalorder %s19, 0
      %p114 = por %p112, %p113
      %s115 = ssub.s32 %s13, %s20
      %p116 = scmp.eq.s32.totalorder %s115, 0
      %s118 = sadd.s32 %s117, 1
      %s119 = scalar_select %p116, %s117, %s118
      %p122 = pneg %p116
      %p123 = scmp.eq.s32.totalorder %s13, 3
      %p124 = por %p122, %p123
      %p125 = scmp.ne.s32.totalorder %s117, %s120
      %p126 = scmp.eq.s32.totalorder %s13, 0
      %p127 = por %p125, %p126
      %p128 = scmp.ne.s32.totalorder %s117, %s120
      %p129 = scmp.eq.s32.totalorder %s18, 3
      %p130 = por %p128, %p129
      %p131 = scmp.ne.s32.totalorder %s120, %s121
      %p132 = scmp.eq.s32.totalorder %s18, 0
      %p133 = por %p131, %p132
      %p134 = scmp.ne.s32.totalorder %s120, %s121
      %p135 = scmp.eq.s32.totalorder %s19, 3
      %p136 = por %p134, %p135
      %p138 = scmp.ne.s32.totalorder %s121, %s137
      %p139 = scmp.eq.s32.totalorder %s19, 0
      %p140 = por %p138, %p139
      %p141 = scmp.le.s32.totalorder 1, %s13
      %p142 = scmp.lt.s32.totalorder %s13, 5
      %p143 = pnand %p141, %p142
      %p144 = pneg %p143
      // Predicated region
      $region9: #{cross_attention_layer.1} parent=5 // pred_check
        _
      $region10: #{cross_attention_layer.1} parent=5 // pred_check_branch
        %146 = sbr.rel (%p143) target = $region12
      $region11: #{cross_attention_layer.1} parent=5 // pred_region
        %s147 = ssub.s32 %s13, 1
        // Predicated region
        $region13: #{cross_attention_layer.1} parent=11 // pred_check
          %p148 = pneg %p86
        $region14: #{cross_attention_layer.1} parent=11 // pred_check_branch
          %150 = sbr.rel (%p148) target = $region16
        $region15: #{cross_attention_layer.1} parent=11 // pred_region
          _
        $region16: #{cross_attention_layer.1} parent=11 // pred_fallthru
          _
        // Predicated region
        $region17: #{cross_attention_layer.1} parent=11 // pred_check
          %p151 = pneg %p107
        $region18: #{cross_attention_layer.1} parent=11 // pred_check_branch
          %153 = sbr.rel (%p151) target = $region20
        $region19: #{cross_attention_layer.1} parent=11 // pred_region
          _
        $region20: #{cross_attention_layer.1} parent=11 // pred_fallthru
          _
      $region12: #{cross_attention_layer.1} parent=5 // pred_fallthru
        _
      %p154 = scmp.lt.s32.totalorder %s13, 4
      // Predicated region
      $region21: #{cross_attention_layer.1} parent=5 // pred_check
        %p155 = pneg %p154
      $region22: #{cross_attention_layer.1} parent=5 // pred_check_branch
        %157 = sbr.rel (%p155) target = $region24
      $region23: #{cross_attention_layer.1} parent=5 // pred_region
        // Predicated region
        $region25: #{cross_attention_layer.1} parent=23 // pred_check
          %p158 = pneg %p33
        $region26: #{cross_attention_layer.1} parent=23 // pred_check_branch
          %160 = sbr.rel (%p158) target = $region28
        $region27: #{cross_attention_layer.1} parent=23 // pred_region
          %p161 = scmp.lt.s32.totalorder %s13, 3
          %s162 = scalar_select %p161, %s13, 3
          %s163 = smul.addr %s162, 4
          %s164 = scalar_lea.vmem %s0, %s163
        $region28: #{cross_attention_layer.1} parent=23 // pred_fallthru
          _
        // Predicated region
        $region29: #{cross_attention_layer.1} parent=23 // pred_check
          %p165 = pneg %p59
        $region30: #{cross_attention_layer.1} parent=23 // pred_check_branch
          %167 = sbr.rel (%p165) target = $region32
        $region31: #{cross_attention_layer.1} parent=23 // pred_region
          %p168 = scmp.lt.s32.totalorder %s13, 3
          %s169 = scalar_select %p168, %s13, 3
          %s170 = smul.addr %s169, 2
          %s171 = smul.addr %s170, 4
          %s172 = scalar_lea.vmem %s1, %s171
        $region32: #{cross_attention_layer.1} parent=23 // pred_fallthru
          _
      $region24: #{cross_attention_layer.1} parent=5 // pred_fallthru
        _
      %p173 = scmp.le.s32.totalorder 1, %s13
      %p174 = scmp.lt.s32.totalorder %s13, 5
      %p175 = pnand %p173, %p174
      %p176 = pneg %p175
      // Predicated region
      $region33: #{cross_attention_layer.1} parent=5 // pred_check
        _
      $region34: #{cross_attention_layer.1} parent=5 // pred_check_branch
        %178 = sbr.rel (%p175) target = $region36
      $region35: #{cross_attention_layer.1} parent=5 // pred_region
        %s179 = ssub.s32 %s13, 1
        %p180 = scmp.lt.s32.totalorder %s18, 3
        %s181 = scalar_select %p180, %s18, 3
        %s182 = smul.addr %s181, 4
        %s183 = scalar_lea.vmem %s0, %s182
        %p184 = pneg %p39
        %p185 = pneg %p36
        %p186 = scmp.lt.s32.totalorder %s18, 3
        %s187 = scalar_select %p186, %s18, 3
        %s188 = smul.addr %s187, 2
        %s189 = smul.addr %s188, 4
        %s190 = scalar_lea.vmem %s1, %s189
        %p191 = pneg %p65
        %p192 = pneg %p62
        %p193 = pneg %p86
        %p194 = pneg %p83
        %p195 = pneg %p107
        %p196 = pneg %p104
        %p197 = pneg %p133
        %p198 = pneg %p130
        %s199 = sand.u32 %s120, 1
        %s200 = scalar_lea.sflag [#allocation3], %s199
        %s201 = sand.u32 %s120, 1
        %s202 = smul.addr %s201, 8
        %s203 = scalar_lea.vmem [#allocation2], %s202
        %p204 = scmp.lt.s32.totalorder %s18, 3
        %s205 = scalar_select %p204, %s18, 3
        %s206 = smul.addr %s205, 4
        %s207 = scalar_lea.vmem %s0, %s206
        %p208 = scmp.lt.s32.totalorder %s18, 3
        %s209 = scalar_select %p208, %s18, 3
        %s210 = smul.addr %s209, 2
        %s211 = smul.addr %s210, 4
        %s212 = scalar_lea.vmem %s1, %s211
        %v214 = vld [vmem:[%s207] sm:$0xf]
        %v215 = vld [vmem:[%s212] sm:$0xf]
        %v216 = vld [vmem:[%s212 + $0x4] sm:$0xf]
        %v217 = vld [vmem:[%s2] sm:$0xf]
        %v218 = vld [vmem:[%s2 + $0x4] sm:$0xf]
        %v219 = vld [vmem:[%s2 + $0x8] sm:$0xf]
        %v220 = vld [vmem:[%s2 + $0xc] sm:$0xf]
        %v225 = vunpack.c.l.b16 %v217
        %v226 = vunpack.c.l.b16 %v218
        %v227 = vunpack.c.l.b16 %v219
        %v228 = vunpack.c.l.b16 %v220
        %v229 = vpack.c.b16 %v226, %v225
        %v230 = vpack.c.b16 %v228, %v227
        %vm233 = vcmask 261120
        %v235 = vsel %vm233, %v214, 0
        %237 = vmatprep.subr.bf16.mxu0 0
        %238 = vmatpush1.bf16.msra.mxu0 %v229
        %239 = vmatprep.subr.bf16.mxu0 0
        %240 = vmatpush1.bf16.msra.mxu0 %v230
        %241 = vmatprep.subr.bf16.mxu0 0
        %242 = vmatpush1.bf16.msra.mxu0 0
        %243 = vmatprep.subr.bf16.mxu0 0
        %244 = vmatpush1.bf16.msra.mxu0 0
        %245 = vmatprep.subr.bf16.mxu0 0
        %246 = vmatpush1.bf16.msra.mxu0 0
        %247 = vmatprep.subr.bf16.mxu0 0
        %248 = vmatpush1.bf16.msra.mxu0 0
        %249 = vmatprep.subr.bf16.mxu0 0
        %250 = vmatpush1.bf16.msra.mxu0 0
        %251 = vmatprep.subr.bf16.mxu0 0
        %252 = vmatpush1.bf16.msra.mxu0 0
        %253 = vmatprep.subr.bf16.mxu0 0
        %254 = vmatpush1.bf16.msra.mxu0 0
        %255 = vmatprep.subr.bf16.mxu0 0
        %256 = vmatpush1.bf16.msra.mxu0 0
        %257 = vmatprep.subr.bf16.mxu0 0
        %258 = vmatpush1.bf16.msra.mxu0 0
        %259 = vmatprep.subr.bf16.mxu0 0
        %260 = vmatpush1.bf16.msra.mxu0 0
        %261 = vmatprep.subr.bf16.mxu0 0
        %262 = vmatpush1.bf16.msra.mxu0 0
        %263 = vmatprep.subr.bf16.mxu0 0
        %264 = vmatpush1.bf16.msra.mxu0 0
        %265 = vmatprep.subr.bf16.mxu0 0
        %266 = vmatpush1.bf16.msra.mxu0 0
        %267 = vmatprep.subr.bf16.mxu0 0
        %268 = vmatpush1.bf16.msra.mxu0 0
        %269 = vmatprep.mubr.bf16.mxu0 0
        %270 = vmatmul.mubr.bf16.gmra.mrb[0].mxu0 %v235
        %v271 = vpop.f32.mrb[0].mxu0
        %v272 = vadd.f32 0.0, %v271
        %v273 = vpop.f32.mrb[0].mxu0
        %v274 = vpop.f32.mrb[0].mxu0
        %v275 = vpop.f32.mrb[0].mxu0
        %276 = vdwg.mxu0
        %v277 = vpack.c.bf16 %v272, %v272
        %v280 = vunpack.c.l.b16 %v215
        %v281 = vunpack.c.l.b16 %v216
        %v282 = vpack.c.b16 %v281, %v280
        %v284 = vsel %vm233, %v277, 0
        %v287 = vsel %vm233, %v282, 0
        %289 = vmatprep.subr.bf16.mxu0 0
        %290 = vmatpush1.bf16.xpose.msra.mxu0 %v287
        %291 = vmatprep.subr.bf16.mxu0 0
        %292 = vmatpush1.bf16.xpose.msra.mxu0 0
        %293 = vmatprep.subr.bf16.mxu0 0
        %294 = vmatpush1.bf16.xpose.msra.mxu0 0
        %295 = vmatprep.subr.bf16.mxu0 0
        %296 = vmatpush1.bf16.xpose.msra.mxu0 0
        %297 = vmatprep.subr.bf16.mxu0 0
        %298 = vmatpush1.bf16.xpose.msra.mxu0 0
        %299 = vmatprep.subr.bf16.mxu0 0
        %300 = vmatpush1.bf16.xpose.msra.mxu0 0
        %301 = vmatprep.subr.bf16.mxu0 0
        %302 = vmatpush1.bf16.xpose.msra.mxu0 0
        %303 = vmatprep.subr.bf16.mxu0 0
        %304 = vmatpush1.bf16.xpose.msra.mxu0 0
        %305 = vmatprep.subr.bf16.mxu0 0
        %306 = vmatpush1.bf16.xpose.msra.mxu0 0
        %307 = vmatprep.subr.bf16.mxu0 0
        %308 = vmatpush1.bf16.xpose.msra.mxu0 0
        %309 = vmatprep.subr.bf16.mxu0 0
        %310 = vmatpush1.bf16.xpose.msra.mxu0 0
        %311 = vmatprep.subr.bf16.mxu0 0
        %312 = vmatpush1.bf16.xpose.msra.mxu0 0
        %313 = vmatprep.subr.bf16.mxu0 0
        %314 = vmatpush1.bf16.xpose.msra.mxu0 0
        %315 = vmatprep.subr.bf16.mxu0 0
        %316 = vmatpush1.bf16.xpose.msra.mxu0 0
        %317 = vmatprep.subr.bf16.mxu0 0
        %318 = vmatpush1.bf16.xpose.msra.mxu0 0
        %319 = vmatprep.subr.bf16.mxu0 0
        %320 = vmatpush1.bf16.xpose.msra.mxu0 0
        %321 = vmatprep.mubr.bf16.mxu0 0
        %322 = vmatmul.mubr.bf16.gmra.mrb[0].mxu0 %v284
        %v323 = vpop.f32.mrb[0].mxu0
        %v324 = vadd.f32 0.0, %v323
        %v325 = vpop.f32.mrb[0].mxu0
        %v326 = vpop.f32.mrb[0].mxu0
        %v327 = vpop.f32.mrb[0].mxu0
        %328 = vdwg.mxu0
        %v329 = vld [vmem:[%s3] sm:$0xf]
        %v330 = vld [vmem:[%s3 + $0x4] sm:$0xf]
        %v331 = vld [vmem:[%s3 + $0x8] sm:$0xf]
        %v332 = vld [vmem:[%s3 + $0xc] sm:$0xf]
        %v337 = vunpack.c.l.b16 %v329
        %v338 = vunpack.c.l.b16 %v330
        %v339 = vunpack.c.l.b16 %v331
        %v340 = vunpack.c.l.b16 %v332
        %v341 = vpack.c.b16 %v338, %v337
        %v342 = vpack.c.b16 %v340, %v339
        %345 = vmatprep.subr.bf16.mxu0 0
        %346 = vmatpush1.bf16.msra.mxu0 %v341
        %347 = vmatprep.subr.bf16.mxu0 0
        %348 = vmatpush1.bf16.msra.mxu0 %v342
        %349 = vmatprep.subr.bf16.mxu0 0
        %350 = vmatpush1.bf16.msra.mxu0 0
        %351 = vmatprep.subr.bf16.mxu0 0
        %352 = vmatpush1.bf16.msra.mxu0 0
        %353 = vmatprep.subr.bf16.mxu0 0
        %354 = vmatpush1.bf16.msra.mxu0 0
        %355 = vmatprep.subr.bf16.mxu0 0
        %356 = vmatpush1.bf16.msra.mxu0 0
        %357 = vmatprep.subr.bf16.mxu0 0
        %358 = vmatpush1.bf16.msra.mxu0 0
        %359 = vmatprep.subr.bf16.mxu0 0
        %360 = vmatpush1.bf16.msra.mxu0 0
        %361 = vmatprep.subr.bf16.mxu0 0
        %362 = vmatpush1.bf16.msra.mxu0 0
        %363 = vmatprep.subr.bf16.mxu0 0
        %364 = vmatpush1.bf16.msra.mxu0 0
        %365 = vmatprep.subr.bf16.mxu0 0
        %366 = vmatpush1.bf16.msra.mxu0 0
        %367 = vmatprep.subr.bf16.mxu0 0
        %368 = vmatpush1.bf16.msra.mxu0 0
        %369 = vmatprep.subr.bf16.mxu0 0
        %370 = vmatpush1.bf16.msra.mxu0 0
        %371 = vmatprep.subr.bf16.mxu0 0
        %372 = vmatpush1.bf16.msra.mxu0 0
        %373 = vmatprep.subr.bf16.mxu0 0
        %374 = vmatpush1.bf16.msra.mxu0 0
        %375 = vmatprep.subr.bf16.mxu0 0
        %376 = vmatpush1.bf16.msra.mxu0 0
        %377 = vmatprep.mubr.bf16.mxu0 0
        %378 = vmatmul.mubr.bf16.gmra.mrb[0].mxu0 %v287
        %v379 = vpop.f32.mrb[0].mxu0
        %v380 = vadd.f32 0.0, %v379
        %v381 = vpop.f32.mrb[0].mxu0
        %v382 = vpop.f32.mrb[0].mxu0
        %v383 = vadd.f32 0.0, %v382
        %v384 = vpop.f32.mrb[0].mxu0
        %385 = vdwg.mxu0
        %vm386 = vcmask 130048
        %v387 = vsel %vm386, %v324, -inf
        %388 = vmax.xlane.f32.xlu0 %v387
        %v389 = vpop.xlane.xlu0 %388
        %v390 = vsub.f32 %v324, %v389
        %v391 = vmul.f32 %v390, 1.442695
        %v392 = vpow.pop %v391
        %v393 = vsel %vm386, %v392, 0.0
        %394 = vadd.xlane.f32.xlu0 %v393
        %v395 = vpop.xlane.xlu0 %394
        %v396 = vrcp.pop %v395
        %v397 = vmul.f32 %v392, %v396
        %v398 = vpack.c.bf16 %v397, %v397
        %v399 = vpack.c.bf16 %v383, %v380
        %v401 = vsel %vm386, %v398, 0
        %403 = vmatprep.subr.bf16.mxu0 0
        %404 = vmatpush1.bf16.msra.mxu0 %v399
        %405 = vmatprep.subr.bf16.mxu0 0
        %406 = vmatpush1.bf16.msra.mxu0 0
        %407 = vmatprep.subr.bf16.mxu0 0
        %408 = vmatpush1.bf16.msra.mxu0 0
        %409 = vmatprep.subr.bf16.mxu0 0
        %410 = vmatpush1.bf16.msra.mxu0 0
        %411 = vmatprep.subr.bf16.mxu0 0
        %412 = vmatpush1.bf16.msra.mxu0 0
        %413 = vmatprep.subr.bf16.mxu0 0
        %414 = vmatpush1.bf16.msra.mxu0 0
        %415 = vmatprep.subr.bf16.mxu0 0
        %416 = vmatpush1.bf16.msra.mxu0 0
        %417 = vmatprep.subr.bf16.mxu0 0
        %418 = vmatpush1.bf16.msra.mxu0 0
        %419 = vmatprep.subr.bf16.mxu0 0
        %420 = vmatpush1.bf16.msra.mxu0 0
        %421 = vmatprep.subr.bf16.mxu0 0
        %422 = vmatpush1.bf16.msra.mxu0 0
        %423 = vmatprep.subr.bf16.mxu0 0
        %424 = vmatpush1.bf16.msra.mxu0 0
        %425 = vmatprep.subr.bf16.mxu0 0
        %426 = vmatpush1.bf16.msra.mxu0 0
        %427 = vmatprep.subr.bf16.mxu0 0
        %428 = vmatpush1.bf16.msra.mxu0 0
        %429 = vmatprep.subr.bf16.mxu0 0
        %430 = vmatpush1.bf16.msra.mxu0 0
        %431 = vmatprep.subr.bf16.mxu0 0
        %432 = vmatpush1.bf16.msra.mxu0 0
        %433 = vmatprep.subr.bf16.mxu0 0
        %434 = vmatpush1.bf16.msra.mxu0 0
        %435 = vmatprep.mubr.bf16.mxu0 0
        %436 = vmatmul.mubr.bf16.gmra.mrb[0].mxu0 %v401
        %v437 = vpop.f32.mrb[0].mxu0
        %v438 = vadd.f32 0.0, %v437
        %v439 = vpop.f32.mrb[0].mxu0
        %v440 = vpop.f32.mrb[0].mxu0
        %v441 = vpop.f32.mrb[0].mxu0
        %442 = vdwg.mxu0
        %vm443 = vcmask 523264
        %444 = vst.msk [vmem:[%s203] sm:$0xff] %vm443, %v438
        %s445 = sand.u32 %s120, 1
        %s446 = scalar_lea.sflag [#allocation3], %s445
        %s447 = sand.u32 %s120, 1
        %s448 = smul.addr %s447, 8
        %s449 = scalar_lea.vmem [#allocation2], %s448
        // Predicated region
        $region37: #{cross_attention_layer.1} parent=35 // pred_check
          %p450 = pneg %p130
        $region38: #{cross_attention_layer.1} parent=35 // pred_check_branch
          %452 = sbr.rel (%p450) target = $region40
        $region39: #{cross_attention_layer.1} parent=35 // pred_region
          %s454 = ssub.s32 128, 128
          %455 = vsyncadd %s446, %s454
          %s456 = smul.addr %s18, 128
          %s457 = scalar_lea.hbm %s4, %s456
          %s459 = sshll.u32 %s449, 4
          %s460 = int_to_ptr.vmem [resolvable:$true] %s459
          %462 = dma.vmem_to_hbm [thread:$0]  %s460, 128, %s457, %s446
        $region40: #{cross_attention_layer.1} parent=35 // pred_fallthru
          _
      $region36: #{cross_attention_layer.1} parent=5 // pred_fallthru
        _
      %p463 = scmp.le.s32.totalorder 2, %s13
      // Predicated region
      $region41: #{cross_attention_layer.1} parent=5 // pred_check
        %p464 = pneg %p463
      $region42: #{cross_attention_layer.1} parent=5 // pred_check_branch
        %466 = sbr.rel (%p464) target = $region44
      $region43: #{cross_attention_layer.1} parent=5 // pred_region
        %s467 = ssub.s32 %s13, 2
        // Predicated region
        $region45: #{cross_attention_layer.1} parent=43 // pred_check
          %p468 = pneg %p136
        $region46: #{cross_attention_layer.1} parent=43 // pred_check_branch
          %470 = sbr.rel (%p468) target = $region48
        $region47: #{cross_attention_layer.1} parent=43 // pred_region
          %s471 = sand.u32 %s121, 1
          %s472 = scalar_lea.sflag [#allocation3], %s471
          %s473 = sand.u32 %s121, 1
          %s474 = smul.addr %s473, 8
          %s475 = scalar_lea.vmem [#allocation2], %s474
          %476 = dma.done %s472, 128
        $region48: #{cross_attention_layer.1} parent=43 // pred_fallthru
          _
      $region44: #{cross_attention_layer.1} parent=5 // pred_fallthru
        _
    $region6: #{cross_attention_layer.1} parent=1 // loop_footer
      %s17 = sadd.s32 1, %s13
    $region7: #{cross_attention_layer.1} parent=1 // loop_footer_branch
      %12 = sbr.rel target = $region3
    $region8: #{cross_attention_layer.1} parent=1 // loop_exit
      _
    %477 = vsyncpa [#allocation3], 1
    %s478 = scalar_lea.sflag [#allocation3], 1
    %479 = vsyncpa %s478, 1

</llo_original>
